<compile_context>
chip_gen: v7x
topology: tpu7x:2x2x1
jax: 0.10.0
libtpu: 0.0.40
codegen_flags: <defaults>
</compile_context>

<pallas_src>
import functools

import jax
import jax.numpy as jnp
from jax.experimental import pallas as pl
from jax.experimental.pallas import tpu as pltpu


def _round_up(x, m):
    return (x + m - 1) // m * m


def _build_tap_masks(H, W, L):
    """Boundary-validity masks for the 8 non-center 3x3 taps, built once.

    Each mask has shape [1, L] (L = NB*HW, images side by side on the lane
    axis) and is keyed on the pixel position *within* an image, so it both
    reproduces zero-padding semantics and zeroes cross-image leakage from the
    circular lane rolls.  The masks are channel-independent and are reused by
    both conv layers (broadcast along channels at the select).
    """
    HW = H * W
    pix = jax.lax.broadcasted_iota(jnp.int32, (1, L), 1) % HW   # pos in image
    col = pix % W
    not_top = pix >= W
    not_bot = pix < (H - 1) * W
    not_left = col > 0
    not_right = col < (W - 1)
    masks = {}
    for ky in range(3):
        for kx in range(3):
            m = None
            if ky == 0:
                m = not_top
            elif ky == 2:
                m = not_bot
            if kx == 0:
                m = not_left if m is None else jnp.logical_and(m, not_left)
            elif kx == 2:
                m = not_right if m is None else jnp.logical_and(m, not_right)
            masks[(ky, kx)] = m
    return masks


def _pad_channels(x, cpad):
    """Zero-pad the channel (sublane) axis of [C, L] up to cpad rows."""
    c, L = x.shape
    if cpad == c:
        return x
    return jnp.concatenate([x, jnp.zeros((cpad - c, L), x.dtype)], axis=0)


def _conv3x3_bn_relu(xp, w_ref, shift_ref, masks, *, W):
    """3x3 same-conv + folded BN + ReLU on a channel-major, lane-batched slab.

    xp:        [Cpad, L] bf16 activation; rows >= Cin are zero.
    w_ref:     Ref[Cout, 9*Cpad] bf16; column (ky*3+kx)*Cpad + ci, BN-scaled,
               zero columns for the pad channels.
    shift_ref: Ref[Cout, 1] f32; folded (bias - mean)*scale + beta.
    returns:   [Cout, L] float32.
    """
    patches = []
    for ky in range(3):
        for kx in range(3):
            off = (ky - 1) * W + (kx - 1)
            # Circular lane roll: patch[:, i] = xp[:, (i + off) % L].
            # Static shift -> two static lane slices + one concat; no doubled
            # [Cin, 2*L] buffer is materialized.
            p = xp if off == 0 else jnp.roll(xp, -off, axis=-1)
            m = masks[(ky, kx)]
            if m is not None:
                p = jnp.where(m, p, jnp.zeros_like(p))
            patches.append(p)
    # One stacked-K MXU dot (K = 9*Cpad) instead of 9 near-empty dots.
    stacked = jnp.concatenate(patches, axis=0)                  # [9*Cpad, L]
    acc = jnp.dot(w_ref[...], stacked, preferred_element_type=jnp.float32)
    acc = acc + shift_ref[...]                                  # f32 epilogue
    return jnp.maximum(acc, 0.0)


def _diffusion_kernel(x_ref, w1_ref, s1_ref, w2_ref, s2_ref, o_ref,
                      *, H, W, Cp1, Cp2):
    # x_ref:  [C, L] bf16  (L = NB*HW; images on the lane axis)
    # w1_ref: [2C, 9*Cp1] bf16   s1_ref: [2C, 1] f32
    # w2_ref: [C, 9*Cp2]  bf16   s2_ref: [C, 1]  f32
    # o_ref:  [C, L] f32
    L = x_ref.shape[-1]
    masks = _build_tap_masks(H, W, L)      # built once, reused by both layers

    x = _pad_channels(x_ref[...], Cp1)                        # [Cp1, L] bf16
    h = _conv3x3_bn_relu(x, w1_ref, s1_ref, masks, W=W)       # [2C, L] f32 (on-chip)
    hb = _pad_channels(h.astype(jnp.bfloat16), Cp2)           # [Cp2, L] bf16
    y = _conv3x3_bn_relu(hb, w2_ref, s2_ref, masks, W=W)      # [C, L] f32
    o_ref[...] = y.astype(o_ref.dtype)                        # lane-dense store


def fold_diffusion_params(params, eps=1e-5):
    """Fold conv bias + eval-mode BatchNorm into bf16 stacked-K weight mats."""
    def fold(w, b, gamma, beta, mean, var):
        cout, cin = w.shape[0], w.shape[1]
        cpad = _round_up(cin, 8)
        scale = gamma / jnp.sqrt(var + eps)
        w_s = w * scale[:, None, None, None]                    # [Cout,Cin,3,3]
        w_t = jnp.transpose(w_s, (0, 2, 3, 1))                  # [Cout,3,3,Cin]
        w_t = jnp.pad(w_t, ((0, 0), (0, 0), (0, 0), (0, cpad - cin)))
        w_mat = w_t.reshape(cout, 9 * cpad)       # col = (ky*3+kx)*cpad + ci
        shift = ((b - mean) * scale + beta).reshape(cout, 1)
        return w_mat.astype(jnp.bfloat16), shift.astype(jnp.float32)

    w1, s1 = fold(params["w1"], params["b1"], params["g1"], params["be1"],
                  params["m1"], params["v1"])
    w2, s2 = fold(params["w2"], params["b2"], params["g2"], params["be2"],
                  params["m2"], params["v2"])
    return {"w1": w1, "s1": s1, "w2": w2, "s2": s2}


def diffusion_forward(x_nchw, folded):
    """Full Diffusion forward. Input/output are NCHW (PyTorch convention)."""
    N, C, H, W = x_nchw.shape
    HW = H * W
    L = N * HW
    C2 = folded["s1"].shape[0]
    Cp1 = folded["w1"].shape[1] // 9
    Cp2 = folded["w2"].shape[1] // 9

    # Channel-major, lane-batched layout: [C, N*HW] (images side by side on
    # the lane axis).  bf16 halves activation bytes moved HBM->VMEM.
    x_cl = jnp.transpose(x_nchw, (1, 0, 2, 3)).reshape(C, L).astype(jnp.bfloat16)

    # Collapse the batch into as few big lane-dense grid steps as possible.
    # Keep 2 "parallel" steps (one per v7x TensorCore) only when each half is
    # still large enough that the ~0.35us/step fixed overhead stays negligible;
    # on v5e/v6e (single TC) one big step is strictly better.
    MIN_LANES_PER_STEP = 1024
    half = (N // 2) * HW
    if N % 2 == 0 and half >= MIN_LANES_PER_STEP and half % 128 == 0:
        n_steps = 2
    else:
        n_steps = 1
    Lb = L // n_steps
    # TODO(synk): for large C / H*W add a spatial (row-block + 1-row halo) grid
    # axis and pl.Buffered(1) on the constant weight operands to bound VMEM on
    # v7x's 64 MiB; unnecessary at these shapes (live data is a few hundred KB).

    kernel = functools.partial(_diffusion_kernel, H=H, W=W, Cp1=Cp1, Cp2=Cp2)

    out_cl = pl.pallas_call(
        kernel,
        out_shape=jax.ShapeDtypeStruct((C, L), jnp.float32),
        grid_spec=pltpu.PrefetchScalarGridSpec(
            num_scalar_prefetch=0,
            grid=(n_steps,),
            in_specs=[
                pl.BlockSpec((C, Lb), lambda s: (0, s)),
                pl.BlockSpec((C2, 9 * Cp1), lambda s: (0, 0)),
                pl.BlockSpec((C2, 1), lambda s: (0, 0)),
                pl.BlockSpec((C, 9 * Cp2), lambda s: (0, 0)),
                pl.BlockSpec((C, 1), lambda s: (0, 0)),
            ],
            out_specs=pl.BlockSpec((C, Lb), lambda s: (0, s)),
        ),
        compiler_params=pltpu.CompilerParams(
            dimension_semantics=("parallel",),
            vmem_limit_bytes=32 * 1024 * 1024,
        ),
    )(x_cl, folded["w1"], folded["s1"], folded["w2"], folded["s2"])

    return jnp.transpose(out_cl.reshape(C, N, H, W), (1, 0, 2, 3))


# ------------------------- pure-JAX reference ------------------------------

def _ref_layer(x, w, b, gamma, beta, mean, var, eps=1e-5):
    out = jax.lax.conv_general_dilated(
        x, w, window_strides=(1, 1), padding="SAME",
        dimension_numbers=("NCHW", "OIHW", "NCHW"),
        precision=jax.lax.Precision.HIGHEST)
    out = out + b[None, :, None, None]
    scale = (gamma / jnp.sqrt(var + eps))[None, :, None, None]
    out = (out - mean[None, :, None, None]) * scale + beta[None, :, None, None]
    return jnp.maximum(out, 0.0)


def _ref_forward(x, p):
    x = _ref_layer(x, p["w1"], p["b1"], p["g1"], p["be1"], p["m1"], p["v1"])
    x = _ref_layer(x, p["w2"], p["b2"], p["g2"], p["be2"], p["m2"], p["v2"])
    return x


def init_params(key, planes):
    """Deterministic parameter init matching nn.Module shapes (distinct keys)."""
    c1, c2 = planes, 2 * planes
    ks = jax.random.split(key, 12)
    f32 = jnp.float32
    return {
        # Conv2d(planes, 2*planes, 3, padding=1, bias=True)
        "w1": 0.1 * jax.random.normal(ks[0], (c2, c1, 3, 3), f32),
        "b1": 0.1 * jax.random.normal(ks[1], (c2,), f32),
        # BatchNorm2d(2*planes): gamma, beta, running_mean, running_var
        "g1": 1.0 + 0.1 * jax.random.normal(ks[2], (c2,), f32),
        "be1": 0.1 * jax.random.normal(ks[3], (c2,), f32),
        "m1": 0.05 * jax.random.normal(ks[4], (c2,), f32),
        "v1": 1.0 + 0.1 * jax.random.uniform(ks[5], (c2,), f32),
        # Conv2d(2*planes, planes, 3, padding=1, bias=True)
        "w2": 0.1 * jax.random.normal(ks[6], (c1, c2, 3, 3), f32),
        "b2": 0.1 * jax.random.normal(ks[7], (c1,), f32),
        # BatchNorm2d(planes)
        "g2": 1.0 + 0.1 * jax.random.normal(ks[8], (c1,), f32),
        "be2": 0.1 * jax.random.normal(ks[9], (c1,), f32),
        "m2": 0.05 * jax.random.normal(ks[10], (c1,), f32),
        "v2": 1.0 + 0.1 * jax.random.uniform(ks[11], (c1,), f32),
    }


if __name__ == "__main__":
    key = jax.random.PRNGKey(0)
    kx, kp = jax.random.split(key)

    planes = 4
    N, H, W = 2, 16, 16
    x = jax.random.normal(kx, (N, planes, H, W), jnp.float32)  # NCHW like PyTorch
    params = init_params(kp, planes)

    folded = fold_diffusion_params(params)        # hoisted out of the hot path
    out = jax.jit(diffusion_forward)(x, folded)
    out = jax.block_until_ready(out)

    ref = _ref_forward(x, params)
    assert out.shape == (N, planes, H, W)
    # bf16 MXU operands (f32 accumulate) vs a Precision.HIGHEST f32 reference:
    # widened tolerance per the perf-review accuracy note.
    assert jnp.allclose(out, ref, atol=5e-2, rtol=5e-2), "mismatch vs JAX reference"

    print("KERNEL_OK")
</pallas_src>

<mosaic_0001>
module attributes {stable_mosaic.version = 11 : i64} {
  func.func @_diffusion_kernel(%arg0: i32, %arg1: memref<4x512xbf16, #tpu.memory_space<vmem>>, %arg2: memref<8x72xbf16, #tpu.memory_space<vmem>>, %arg3: memref<8x1xf32, #tpu.memory_space<vmem>>, %arg4: memref<4x72xbf16, #tpu.memory_space<vmem>>, %arg5: memref<4x1xf32, #tpu.memory_space<vmem>>, %arg6: memref<4x512xf32, #tpu.memory_space<vmem>>) attributes {dimension_semantics = [#tpu.dimension_semantics<parallel>], iteration_bounds = array<i64: 1>, scalar_prefetch = 0 : i64, scratch_operands = 0 : i64, tpu.core_type = #tpu.core_type<tc>, window_params = [{transform_indices = @transform_0, window_bounds = array<i64: 4, 512>}, {pipeline_mode = #tpu.pipeline_mode<synchronous>, transform_indices = @transform_1, window_bounds = array<i64: 8, 72>}, {pipeline_mode = #tpu.pipeline_mode<synchronous>, transform_indices = @transform_2, window_bounds = array<i64: 8, 1>}, {pipeline_mode = #tpu.pipeline_mode<synchronous>, transform_indices = @transform_3, window_bounds = array<i64: 4, 72>}, {pipeline_mode = #tpu.pipeline_mode<synchronous>, transform_indices = @transform_4, window_bounds = array<i64: 4, 1>}, {transform_indices = @transform_5, window_bounds = array<i64: 4, 512>}]} {
    %0 = tpu.iota {dimensions = array<i32: 1>} : vector<1x512xi32>
    %c256_i32 = arith.constant 256 : i32
    %c0_i32 = arith.constant 0 : i32
    %1 = arith.cmpi eq, %c256_i32, %c0_i32 : i32
    %c1_i32 = arith.constant 1 : i32
    %2 = arith.select %1, %c1_i32, %c256_i32 : i32
    %3 = vector.broadcast %2 : i32 to vector<1x512xi32>
    %4 = arith.remsi %0, %3 : vector<1x512xi32>
    %c0_i32_0 = arith.constant 0 : i32
    %5 = vector.broadcast %c0_i32_0 : i32 to vector<1x512xi32>
    %6 = arith.cmpi ne, %4, %5 : vector<1x512xi32>
    %c0_i32_1 = arith.constant 0 : i32
    %7 = vector.broadcast %c0_i32_1 : i32 to vector<1x512xi32>
    %8 = arith.cmpi slt, %4, %7 : vector<1x512xi32>
    %c0_i32_2 = arith.constant 0 : i32
    %9 = arith.cmpi slt, %2, %c0_i32_2 : i32
    %10 = vector.broadcast %9 : i1 to vector<1x512xi1>
    %11 = vector.broadcast %10 : vector<1x512xi1> to vector<1x512xi1>
    %12 = arith.xori %8, %11 : vector<1x512xi1>
    %13 = arith.andi %12, %6 : vector<1x512xi1>
    %14 = vector.broadcast %2 : i32 to vector<1x512xi32>
    %15 = arith.addi %4, %14 : vector<1x512xi32>
    %16 = arith.select %13, %15, %4 : vector<1x512xi1>, vector<1x512xi32>
    %c16_i32 = arith.constant 16 : i32
    %c0_i32_3 = arith.constant 0 : i32
    %17 = arith.cmpi eq, %c16_i32, %c0_i32_3 : i32
    %c1_i32_4 = arith.constant 1 : i32
    %18 = arith.select %17, %c1_i32_4, %c16_i32 : i32
    %19 = vector.broadcast %18 : i32 to vector<1x512xi32>
    %20 = arith.remsi %16, %19 : vector<1x512xi32>
    %c0_i32_5 = arith.constant 0 : i32
    %21 = vector.broadcast %c0_i32_5 : i32 to vector<1x512xi32>
    %22 = arith.cmpi ne, %20, %21 : vector<1x512xi32>
    %c0_i32_6 = arith.constant 0 : i32
    %23 = vector.broadcast %c0_i32_6 : i32 to vector<1x512xi32>
    %24 = arith.cmpi slt, %20, %23 : vector<1x512xi32>
    %c0_i32_7 = arith.constant 0 : i32
    %25 = arith.cmpi slt, %18, %c0_i32_7 : i32
    %26 = vector.broadcast %25 : i1 to vector<1x512xi1>
    %27 = vector.broadcast %26 : vector<1x512xi1> to vector<1x512xi1>
    %28 = arith.xori %24, %27 : vector<1x512xi1>
    %29 = arith.andi %28, %22 : vector<1x512xi1>
    %30 = vector.broadcast %18 : i32 to vector<1x512xi32>
    %31 = arith.addi %20, %30 : vector<1x512xi32>
    %32 = arith.select %29, %31, %20 : vector<1x512xi1>, vector<1x512xi32>
    %c16_i32_8 = arith.constant 16 : i32
    %33 = vector.broadcast %c16_i32_8 : i32 to vector<1x512xi32>
    %34 = arith.cmpi sge, %16, %33 : vector<1x512xi32>
    %c240_i32 = arith.constant 240 : i32
    %35 = vector.broadcast %c240_i32 : i32 to vector<1x512xi32>
    %36 = arith.cmpi slt, %16, %35 : vector<1x512xi32>
    %c0_i32_9 = arith.constant 0 : i32
    %37 = vector.broadcast %c0_i32_9 : i32 to vector<1x512xi32>
    %38 = arith.cmpi sgt, %32, %37 : vector<1x512xi32>
    %c15_i32 = arith.constant 15 : i32
    %39 = vector.broadcast %c15_i32 : i32 to vector<1x512xi32>
    %40 = arith.cmpi slt, %32, %39 : vector<1x512xi32>
    %41 = arith.andi %34, %38 : vector<1x512xi1>
    %42 = arith.andi %34, %40 : vector<1x512xi1>
    %43 = arith.andi %36, %38 : vector<1x512xi1>
    %44 = arith.andi %36, %40 : vector<1x512xi1>
    %c0 = arith.constant 0 : index
    %c0_10 = arith.constant 0 : index
    %45 = vector.load %arg1[%c0, %c0_10] : memref<4x512xbf16, #tpu.memory_space<vmem>>, vector<4x512xbf16>
    %cst = arith.constant 0.000000e+00 : bf16
    %46 = vector.broadcast %cst : bf16 to vector<4x512xbf16>
    %47 = tpu.concatenate %45, %46 in 0 : vector<4x512xbf16>, vector<4x512xbf16> -> vector<8x512xbf16>
    %48 = vector.extract_strided_slice %47 {offsets = [0, 495], sizes = [8, 17], strides = [1, 1]} : vector<8x512xbf16> to vector<8x17xbf16>
    %49 = vector.extract_strided_slice %47 {offsets = [0, 0], sizes = [8, 495], strides = [1, 1]} : vector<8x512xbf16> to vector<8x495xbf16>
    %50 = tpu.concatenate %48, %49 in 1 : vector<8x17xbf16>, vector<8x495xbf16> -> vector<8x512xbf16>
    %cst_11 = arith.constant 0.000000e+00 : bf16
    %51 = vector.broadcast %cst_11 : bf16 to vector<8x512xbf16>
    %52 = vector.shape_cast %41 : vector<1x512xi1> to vector<1x512xi1>
    %53 = vector.broadcast %52 : vector<1x512xi1> to vector<8x512xi1>
    %54 = arith.select %53, %50, %51 : vector<8x512xi1>, vector<8x512xbf16>
    %55 = vector.extract_strided_slice %47 {offsets = [0, 496], sizes = [8, 16], strides = [1, 1]} : vector<8x512xbf16> to vector<8x16xbf16>
    %56 = vector.extract_strided_slice %47 {offsets = [0, 0], sizes = [8, 496], strides = [1, 1]} : vector<8x512xbf16> to vector<8x496xbf16>
    %57 = tpu.concatenate %55, %56 in 1 : vector<8x16xbf16>, vector<8x496xbf16> -> vector<8x512xbf16>
    %cst_12 = arith.constant 0.000000e+00 : bf16
    %58 = vector.broadcast %cst_12 : bf16 to vector<8x512xbf16>
    %59 = vector.shape_cast %34 : vector<1x512xi1> to vector<1x512xi1>
    %60 = vector.broadcast %59 : vector<1x512xi1> to vector<8x512xi1>
    %61 = arith.select %60, %57, %58 : vector<8x512xi1>, vector<8x512xbf16>
    %62 = vector.extract_strided_slice %47 {offsets = [0, 497], sizes = [8, 15], strides = [1, 1]} : vector<8x512xbf16> to vector<8x15xbf16>
    %63 = vector.extract_strided_slice %47 {offsets = [0, 0], sizes = [8, 497], strides = [1, 1]} : vector<8x512xbf16> to vector<8x497xbf16>
    %64 = tpu.concatenate %62, %63 in 1 : vector<8x15xbf16>, vector<8x497xbf16> -> vector<8x512xbf16>
    %cst_13 = arith.constant 0.000000e+00 : bf16
    %65 = vector.broadcast %cst_13 : bf16 to vector<8x512xbf16>
    %66 = vector.shape_cast %42 : vector<1x512xi1> to vector<1x512xi1>
    %67 = vector.broadcast %66 : vector<1x512xi1> to vector<8x512xi1>
    %68 = arith.select %67, %64, %65 : vector<8x512xi1>, vector<8x512xbf16>
    %69 = vector.extract_strided_slice %47 {offsets = [0, 511], sizes = [8, 1], strides = [1, 1]} : vector<8x512xbf16> to vector<8x1xbf16>
    %70 = vector.extract_strided_slice %47 {offsets = [0, 0], sizes = [8, 511], strides = [1, 1]} : vector<8x512xbf16> to vector<8x511xbf16>
    %71 = tpu.concatenate %69, %70 in 1 : vector<8x1xbf16>, vector<8x511xbf16> -> vector<8x512xbf16>
    %cst_14 = arith.constant 0.000000e+00 : bf16
    %72 = vector.broadcast %cst_14 : bf16 to vector<8x512xbf16>
    %73 = vector.shape_cast %38 : vector<1x512xi1> to vector<1x512xi1>
    %74 = vector.broadcast %73 : vector<1x512xi1> to vector<8x512xi1>
    %75 = arith.select %74, %71, %72 : vector<8x512xi1>, vector<8x512xbf16>
    %76 = vector.extract_strided_slice %47 {offsets = [0, 1], sizes = [8, 511], strides = [1, 1]} : vector<8x512xbf16> to vector<8x511xbf16>
    %77 = vector.extract_strided_slice %47 {offsets = [0, 0], sizes = [8, 1], strides = [1, 1]} : vector<8x512xbf16> to vector<8x1xbf16>
    %78 = tpu.concatenate %76, %77 in 1 : vector<8x511xbf16>, vector<8x1xbf16> -> vector<8x512xbf16>
    %cst_15 = arith.constant 0.000000e+00 : bf16
    %79 = vector.broadcast %cst_15 : bf16 to vector<8x512xbf16>
    %80 = vector.shape_cast %40 : vector<1x512xi1> to vector<1x512xi1>
    %81 = vector.broadcast %80 : vector<1x512xi1> to vector<8x512xi1>
    %82 = arith.select %81, %78, %79 : vector<8x512xi1>, vector<8x512xbf16>
    %83 = vector.extract_strided_slice %47 {offsets = [0, 15], sizes = [8, 497], strides = [1, 1]} : vector<8x512xbf16> to vector<8x497xbf16>
    %84 = vector.extract_strided_slice %47 {offsets = [0, 0], sizes = [8, 15], strides = [1, 1]} : vector<8x512xbf16> to vector<8x15xbf16>
    %85 = tpu.concatenate %83, %84 in 1 : vector<8x497xbf16>, vector<8x15xbf16> -> vector<8x512xbf16>
    %cst_16 = arith.constant 0.000000e+00 : bf16
    %86 = vector.broadcast %cst_16 : bf16 to vector<8x512xbf16>
    %87 = vector.shape_cast %43 : vector<1x512xi1> to vector<1x512xi1>
    %88 = vector.broadcast %87 : vector<1x512xi1> to vector<8x512xi1>
    %89 = arith.select %88, %85, %86 : vector<8x512xi1>, vector<8x512xbf16>
    %90 = vector.extract_strided_slice %47 {offsets = [0, 16], sizes = [8, 496], strides = [1, 1]} : vector<8x512xbf16> to vector<8x496xbf16>
    %91 = vector.extract_strided_slice %47 {offsets = [0, 0], sizes = [8, 16], strides = [1, 1]} : vector<8x512xbf16> to vector<8x16xbf16>
    %92 = tpu.concatenate %90, %91 in 1 : vector<8x496xbf16>, vector<8x16xbf16> -> vector<8x512xbf16>
    %cst_17 = arith.constant 0.000000e+00 : bf16
    %93 = vector.broadcast %cst_17 : bf16 to vector<8x512xbf16>
    %94 = vector.shape_cast %36 : vector<1x512xi1> to vector<1x512xi1>
    %95 = vector.broadcast %94 : vector<1x512xi1> to vector<8x512xi1>
    %96 = arith.select %95, %92, %93 : vector<8x512xi1>, vector<8x512xbf16>
    %97 = vector.extract_strided_slice %47 {offsets = [0, 17], sizes = [8, 495], strides = [1, 1]} : vector<8x512xbf16> to vector<8x495xbf16>
    %98 = vector.extract_strided_slice %47 {offsets = [0, 0], sizes = [8, 17], strides = [1, 1]} : vector<8x512xbf16> to vector<8x17xbf16>
    %99 = tpu.concatenate %97, %98 in 1 : vector<8x495xbf16>, vector<8x17xbf16> -> vector<8x512xbf16>
    %cst_18 = arith.constant 0.000000e+00 : bf16
    %100 = vector.broadcast %cst_18 : bf16 to vector<8x512xbf16>
    %101 = vector.shape_cast %44 : vector<1x512xi1> to vector<1x512xi1>
    %102 = vector.broadcast %101 : vector<1x512xi1> to vector<8x512xi1>
    %103 = arith.select %102, %99, %100 : vector<8x512xi1>, vector<8x512xbf16>
    %104 = tpu.concatenate %54, %61, %68, %75, %47, %82, %89, %96, %103 in 0 : vector<8x512xbf16>, vector<8x512xbf16>, vector<8x512xbf16>, vector<8x512xbf16>, vector<8x512xbf16>, vector<8x512xbf16>, vector<8x512xbf16>, vector<8x512xbf16>, vector<8x512xbf16> -> vector<72x512xbf16>
    %c0_19 = arith.constant 0 : index
    %c0_20 = arith.constant 0 : index
    %105 = vector.load %arg2[%c0_19, %c0_20] : memref<8x72xbf16, #tpu.memory_space<vmem>>, vector<8x72xbf16>
    %cst_21 = arith.constant dense<0.000000e+00> : vector<8x512xf32>
    %106 = tpu.matmul %105, %104, %cst_21 {dimension_numbers = #tpu.dot_dimension_numbers<[1], [0], [0], [1], [0, 0, 1, 1], [], []>} : vector<8x72xbf16>, vector<72x512xbf16>, vector<8x512xf32> -> vector<8x512xf32>
    %c0_22 = arith.constant 0 : index
    %c0_23 = arith.constant 0 : index
    %107 = vector.load %arg3[%c0_22, %c0_23] : memref<8x1xf32, #tpu.memory_space<vmem>>, vector<8x1xf32>
    %108 = vector.broadcast %107 : vector<8x1xf32> to vector<8x512xf32>
    %109 = arith.addf %106, %108 : vector<8x512xf32>
    %cst_24 = arith.constant 0.000000e+00 : f32
    %110 = vector.broadcast %cst_24 : f32 to vector<8x512xf32>
    %111 = arith.maximumf %109, %110 : vector<8x512xf32>
    %112 = arith.truncf %111 : vector<8x512xf32> to vector<8x512xbf16>
    %113 = vector.extract_strided_slice %112 {offsets = [0, 495], sizes = [8, 17], strides = [1, 1]} : vector<8x512xbf16> to vector<8x17xbf16>
    %114 = vector.extract_strided_slice %112 {offsets = [0, 0], sizes = [8, 495], strides = [1, 1]} : vector<8x512xbf16> to vector<8x495xbf16>
    %115 = tpu.concatenate %113, %114 in 1 : vector<8x17xbf16>, vector<8x495xbf16> -> vector<8x512xbf16>
    %cst_25 = arith.constant 0.000000e+00 : bf16
    %116 = vector.broadcast %cst_25 : bf16 to vector<8x512xbf16>
    %117 = vector.shape_cast %41 : vector<1x512xi1> to vector<1x512xi1>
    %118 = vector.broadcast %117 : vector<1x512xi1> to vector<8x512xi1>
    %119 = arith.select %118, %115, %116 : vector<8x512xi1>, vector<8x512xbf16>
    %120 = vector.extract_strided_slice %112 {offsets = [0, 496], sizes = [8, 16], strides = [1, 1]} : vector<8x512xbf16> to vector<8x16xbf16>
    %121 = vector.extract_strided_slice %112 {offsets = [0, 0], sizes = [8, 496], strides = [1, 1]} : vector<8x512xbf16> to vector<8x496xbf16>
    %122 = tpu.concatenate %120, %121 in 1 : vector<8x16xbf16>, vector<8x496xbf16> -> vector<8x512xbf16>
    %cst_26 = arith.constant 0.000000e+00 : bf16
    %123 = vector.broadcast %cst_26 : bf16 to vector<8x512xbf16>
    %124 = vector.shape_cast %34 : vector<1x512xi1> to vector<1x512xi1>
    %125 = vector.broadcast %124 : vector<1x512xi1> to vector<8x512xi1>
    %126 = arith.select %125, %122, %123 : vector<8x512xi1>, vector<8x512xbf16>
    %127 = vector.extract_strided_slice %112 {offsets = [0, 497], sizes = [8, 15], strides = [1, 1]} : vector<8x512xbf16> to vector<8x15xbf16>
    %128 = vector.extract_strided_slice %112 {offsets = [0, 0], sizes = [8, 497], strides = [1, 1]} : vector<8x512xbf16> to vector<8x497xbf16>
    %129 = tpu.concatenate %127, %128 in 1 : vector<8x15xbf16>, vector<8x497xbf16> -> vector<8x512xbf16>
    %cst_27 = arith.constant 0.000000e+00 : bf16
    %130 = vector.broadcast %cst_27 : bf16 to vector<8x512xbf16>
    %131 = vector.shape_cast %42 : vector<1x512xi1> to vector<1x512xi1>
    %132 = vector.broadcast %131 : vector<1x512xi1> to vector<8x512xi1>
    %133 = arith.select %132, %129, %130 : vector<8x512xi1>, vector<8x512xbf16>
    %134 = vector.extract_strided_slice %112 {offsets = [0, 511], sizes = [8, 1], strides = [1, 1]} : vector<8x512xbf16> to vector<8x1xbf16>
    %135 = vector.extract_strided_slice %112 {offsets = [0, 0], sizes = [8, 511], strides = [1, 1]} : vector<8x512xbf16> to vector<8x511xbf16>
    %136 = tpu.concatenate %134, %135 in 1 : vector<8x1xbf16>, vector<8x511xbf16> -> vector<8x512xbf16>
    %cst_28 = arith.constant 0.000000e+00 : bf16
    %137 = vector.broadcast %cst_28 : bf16 to vector<8x512xbf16>
    %138 = vector.shape_cast %38 : vector<1x512xi1> to vector<1x512xi1>
    %139 = vector.broadcast %138 : vector<1x512xi1> to vector<8x512xi1>
    %140 = arith.select %139, %136, %137 : vector<8x512xi1>, vector<8x512xbf16>
    %141 = vector.extract_strided_slice %112 {offsets = [0, 1], sizes = [8, 511], strides = [1, 1]} : vector<8x512xbf16> to vector<8x511xbf16>
    %142 = vector.extract_strided_slice %112 {offsets = [0, 0], sizes = [8, 1], strides = [1, 1]} : vector<8x512xbf16> to vector<8x1xbf16>
    %143 = tpu.concatenate %141, %142 in 1 : vector<8x511xbf16>, vector<8x1xbf16> -> vector<8x512xbf16>
    %cst_29 = arith.constant 0.000000e+00 : bf16
    %144 = vector.broadcast %cst_29 : bf16 to vector<8x512xbf16>
    %145 = vector.shape_cast %40 : vector<1x512xi1> to vector<1x512xi1>
    %146 = vector.broadcast %145 : vector<1x512xi1> to vector<8x512xi1>
    %147 = arith.select %146, %143, %144 : vector<8x512xi1>, vector<8x512xbf16>
    %148 = vector.extract_strided_slice %112 {offsets = [0, 15], sizes = [8, 497], strides = [1, 1]} : vector<8x512xbf16> to vector<8x497xbf16>
    %149 = vector.extract_strided_slice %112 {offsets = [0, 0], sizes = [8, 15], strides = [1, 1]} : vector<8x512xbf16> to vector<8x15xbf16>
    %150 = tpu.concatenate %148, %149 in 1 : vector<8x497xbf16>, vector<8x15xbf16> -> vector<8x512xbf16>
    %cst_30 = arith.constant 0.000000e+00 : bf16
    %151 = vector.broadcast %cst_30 : bf16 to vector<8x512xbf16>
    %152 = vector.shape_cast %43 : vector<1x512xi1> to vector<1x512xi1>
    %153 = vector.broadcast %152 : vector<1x512xi1> to vector<8x512xi1>
    %154 = arith.select %153, %150, %151 : vector<8x512xi1>, vector<8x512xbf16>
    %155 = vector.extract_strided_slice %112 {offsets = [0, 16], sizes = [8, 496], strides = [1, 1]} : vector<8x512xbf16> to vector<8x496xbf16>
    %156 = vector.extract_strided_slice %112 {offsets = [0, 0], sizes = [8, 16], strides = [1, 1]} : vector<8x512xbf16> to vector<8x16xbf16>
    %157 = tpu.concatenate %155, %156 in 1 : vector<8x496xbf16>, vector<8x16xbf16> -> vector<8x512xbf16>
    %cst_31 = arith.constant 0.000000e+00 : bf16
    %158 = vector.broadcast %cst_31 : bf16 to vector<8x512xbf16>
    %159 = vector.shape_cast %36 : vector<1x512xi1> to vector<1x512xi1>
    %160 = vector.broadcast %159 : vector<1x512xi1> to vector<8x512xi1>
    %161 = arith.select %160, %157, %158 : vector<8x512xi1>, vector<8x512xbf16>
    %162 = vector.extract_strided_slice %112 {offsets = [0, 17], sizes = [8, 495], strides = [1, 1]} : vector<8x512xbf16> to vector<8x495xbf16>
    %163 = vector.extract_strided_slice %112 {offsets = [0, 0], sizes = [8, 17], strides = [1, 1]} : vector<8x512xbf16> to vector<8x17xbf16>
    %164 = tpu.concatenate %162, %163 in 1 : vector<8x495xbf16>, vector<8x17xbf16> -> vector<8x512xbf16>
    %cst_32 = arith.constant 0.000000e+00 : bf16
    %165 = vector.broadcast %cst_32 : bf16 to vector<8x512xbf16>
    %166 = vector.shape_cast %44 : vector<1x512xi1> to vector<1x512xi1>
    %167 = vector.broadcast %166 : vector<1x512xi1> to vector<8x512xi1>
    %168 = arith.select %167, %164, %165 : vector<8x512xi1>, vector<8x512xbf16>
    %169 = tpu.concatenate %119, %126, %133, %140, %112, %147, %154, %161, %168 in 0 : vector<8x512xbf16>, vector<8x512xbf16>, vector<8x512xbf16>, vector<8x512xbf16>, vector<8x512xbf16>, vector<8x512xbf16>, vector<8x512xbf16>, vector<8x512xbf16>, vector<8x512xbf16> -> vector<72x512xbf16>
    %c0_33 = arith.constant 0 : index
    %c0_34 = arith.constant 0 : index
    %170 = vector.load %arg4[%c0_33, %c0_34] : memref<4x72xbf16, #tpu.memory_space<vmem>>, vector<4x72xbf16>
    %cst_35 = arith.constant dense<0.000000e+00> : vector<4x512xf32>
    %171 = tpu.matmul %170, %169, %cst_35 {dimension_numbers = #tpu.dot_dimension_numbers<[1], [0], [0], [1], [0, 0, 1, 1], [], []>} : vector<4x72xbf16>, vector<72x512xbf16>, vector<4x512xf32> -> vector<4x512xf32>
    %c0_36 = arith.constant 0 : index
    %c0_37 = arith.constant 0 : index
    %172 = vector.load %arg5[%c0_36, %c0_37] : memref<4x1xf32, #tpu.memory_space<vmem>>, vector<4x1xf32>
    %173 = vector.broadcast %172 : vector<4x1xf32> to vector<4x512xf32>
    %174 = arith.addf %171, %173 : vector<4x512xf32>
    %cst_38 = arith.constant 0.000000e+00 : f32
    %175 = vector.broadcast %cst_38 : f32 to vector<4x512xf32>
    %176 = arith.maximumf %174, %175 : vector<4x512xf32>
    %c0_39 = arith.constant 0 : index
    %c0_40 = arith.constant 0 : index
    %177 = vector.load %arg6[%c0_39, %c0_40] : memref<4x512xf32, #tpu.memory_space<vmem>>, vector<4x512xf32>
    tpu.vector_store %arg6[%c0_39, %c0_40], %176 {strides = array<i32>} : memref<4x512xf32, #tpu.memory_space<vmem>>, vector<4x512xf32>,
    return
  }
  func.func @transform_0(%arg0: i32) -> (i32, i32) {
    %c0_i32 = arith.constant 0 : i32
    %c0_i32_0 = arith.constant 0 : i32
    return %c0_i32, %arg0 : i32, i32
  }
  func.func @transform_1(%arg0: i32) -> (i32, i32) {
    %c0_i32 = arith.constant 0 : i32
    %c0_i32_0 = arith.constant 0 : i32
    %c0_i32_1 = arith.constant 0 : i32
    return %c0_i32, %c0_i32_0 : i32, i32
  }
  func.func @transform_2(%arg0: i32) -> (i32, i32) {
    %c0_i32 = arith.constant 0 : i32
    %c0_i32_0 = arith.constant 0 : i32
    %c0_i32_1 = arith.constant 0 : i32
    return %c0_i32, %c0_i32_0 : i32, i32
  }
  func.func @transform_3(%arg0: i32) -> (i32, i32) {
    %c0_i32 = arith.constant 0 : i32
    %c0_i32_0 = arith.constant 0 : i32
    %c0_i32_1 = arith.constant 0 : i32
    return %c0_i32, %c0_i32_0 : i32, i32
  }
  func.func @transform_4(%arg0: i32) -> (i32, i32) {
    %c0_i32 = arith.constant 0 : i32
    %c0_i32_0 = arith.constant 0 : i32
    %c0_i32_1 = arith.constant 0 : i32
    return %c0_i32, %c0_i32_0 : i32, i32
  }
  func.func @transform_5(%arg0: i32) -> (i32, i32) {
    %c0_i32 = arith.constant 0 : i32
    %c0_i32_0 = arith.constant 0 : i32
    return %c0_i32, %arg0 : i32, i32
  }
}

</mosaic_0001>

<llo_original>
// kernel: diffusion_forward.1
$region0: #{diffusion_forward.1}
  #allocation0 [shape = 'u32[]', space=smem, size = 0x4, offset = 0x4, fixed_abs, tag = 'smem constant byte address 0x4 - core index']
  #allocation1 [shape = 'u32[144,128]{1,0:T(1,128)}', space=vmem, size = 0x12000, scoped, tag = 'internal scratch']
  %s0 = inlined_call_operand.vmem [shape: bf16[4,512], index: 0, kind: input, shape index: {}]
  %s1 = inlined_call_operand.vmem [shape: bf16[8,72], index: 1, kind: input, shape index: {}]
  %s2 = inlined_call_operand.vmem [shape: f32[8,1], index: 2, kind: input, shape index: {}]
  %s3 = inlined_call_operand.vmem [shape: bf16[4,72], index: 3, kind: input, shape index: {}]
  %s4 = inlined_call_operand.vmem [shape: f32[4,1], index: 4, kind: input, shape index: {}]
  %s5 = inlined_call_operand.vmem [shape: f32[4,512], index: 5, kind: output, shape index: {}]
  %s6 = sld [smem:[#allocation0]]
  $region30: #{diffusion_forward.1} parent=0
    _
  %s8 = ssub.s32 1, %s6
  %s9 = scalar_select 0, %s8, %s6
  // Predicated region
  $region2: #{diffusion_forward.1} parent=0 // pred_check
    _
  $region3: #{diffusion_forward.1} parent=0 // pred_check_branch
    %11 = sbr.rel (0) target = $region5
  $region4: #{diffusion_forward.1} parent=0 // pred_region
    _
  $region5: #{diffusion_forward.1} parent=0 // pred_fallthru
    _
  // Predicated region
  $region6: #{diffusion_forward.1} parent=0 // pred_check
    _
  $region7: #{diffusion_forward.1} parent=0 // pred_check_branch
    %13 = sbr.rel (0) target = $region9
  $region8: #{diffusion_forward.1} parent=0 // pred_region
    _
  $region9: #{diffusion_forward.1} parent=0 // pred_fallthru
    _
  // Predicated region
  $region10: #{diffusion_forward.1} parent=0 // pred_check
    _
  $region11: #{diffusion_forward.1} parent=0 // pred_check_branch
    %15 = sbr.rel (0) target = $region13
  $region12: #{diffusion_forward.1} parent=0 // pred_region
    _
  $region13: #{diffusion_forward.1} parent=0 // pred_fallthru
    _
  // Predicated region
  $region14: #{diffusion_forward.1} parent=0 // pred_check
    _
  $region15: #{diffusion_forward.1} parent=0 // pred_check_branch
    %17 = sbr.rel (0) target = $region17
  $region16: #{diffusion_forward.1} parent=0 // pred_region
    _
  $region17: #{diffusion_forward.1} parent=0 // pred_fallthru
    _
  // Predicated region
  $region18: #{diffusion_forward.1} parent=0 // pred_check
    _
  $region19: #{diffusion_forward.1} parent=0 // pred_check_branch
    %19 = sbr.rel (0) target = $region21
  $region20: #{diffusion_forward.1} parent=0 // pred_region
    _
  $region21: #{diffusion_forward.1} parent=0 // pred_fallthru
    _
  %v23 = vlaneseq
  %v24 = vand.u32 %v23, 127
  %v25 = vadd.s32 %v24, 128
  %v26 = vadd.s32 %v24, 256
  %v27 = vadd.s32 %v24, 384
  %vm28 = vcmp.lt.s32.totalorder %v24, 0
  %v29 = vsub.s32 0, %v24
  %v30 = vsel %vm28, %v29, %v24
  %v31 = vshrl.u32 %v30, 8
  %v32 = vand.u32 %v30, 255
  %v33 = vsub.s32 0, %v32
  %v34 = vsel %vm28, %v33, %v32
  %vm35 = vcmp.lt.s32.totalorder %v25, 0
  %v36 = vsub.s32 0, %v25
  %v37 = vsel %vm35, %v36, %v25
  %v38 = vshrl.u32 %v37, 8
  %v39 = vand.u32 %v37, 255
  %v40 = vsub.s32 0, %v39
  %v41 = vsel %vm35, %v40, %v39
  %vm42 = vcmp.lt.s32.totalorder %v26, 0
  %v43 = vsub.s32 0, %v26
  %v44 = vsel %vm42, %v43, %v26
  %v45 = vshrl.u32 %v44, 8
  %v46 = vand.u32 %v44, 255
  %v47 = vsub.s32 0, %v46
  %v48 = vsel %vm42, %v47, %v46
  %vm49 = vcmp.lt.s32.totalorder %v27, 0
  %v50 = vsub.s32 0, %v27
  %v51 = vsel %vm49, %v50, %v27
  %v52 = vshrl.u32 %v51, 8
  %v53 = vand.u32 %v51, 255
  %v54 = vsub.s32 0, %v53
  %v55 = vsel %vm49, %v54, %v53
  %vm56 = vcmp.ne.s32.totalorder %v34, 0
  %vm57 = vcmp.ne.s32.totalorder %v41, 0
  %vm58 = vcmp.ne.s32.totalorder %v48, 0
  %vm59 = vcmp.ne.s32.totalorder %v55, 0
  %vm60 = vcmp.lt.s32.totalorder %v34, 0
  %vm61 = vcmp.lt.s32.totalorder %v41, 0
  %vm62 = vcmp.lt.s32.totalorder %v48, 0
  %vm63 = vcmp.lt.s32.totalorder %v55, 0
  %vm64 = vmand %vm60, %vm56
  %vm65 = vmand %vm61, %vm57
  %vm66 = vmand %vm62, %vm58
  %vm67 = vmand %vm63, %vm59
  %v68 = vadd.s32 %v34, 256
  %v69 = vadd.s32 %v41, 256
  %v70 = vadd.s32 %v48, 256
  %v71 = vadd.s32 %v55, 256
  %v72 = vsel %vm64, %v68, %v34
  %v73 = vsel %vm65, %v69, %v41
  %v74 = vsel %vm66, %v70, %v48
  %v75 = vsel %vm67, %v71, %v55
  %vm76 = vcmp.lt.s32.totalorder %v72, 0
  %v77 = vsub.s32 0, %v72
  %v78 = vsel %vm76, %v77, %v72
  %v79 = vshrl.u32 %v78, 4
  %v80 = vand.u32 %v78, 15
  %v81 = vsub.s32 0, %v80
  %v82 = vsel %vm76, %v81, %v80
  %vm83 = vcmp.lt.s32.totalorder %v73, 0
  %v84 = vsub.s32 0, %v73
  %v85 = vsel %vm83, %v84, %v73
  %v86 = vshrl.u32 %v85, 4
  %v87 = vand.u32 %v85, 15
  %v88 = vsub.s32 0, %v87
  %v89 = vsel %vm83, %v88, %v87
  %vm90 = vcmp.lt.s32.totalorder %v74, 0
  %v91 = vsub.s32 0, %v74
  %v92 = vsel %vm90, %v91, %v74
  %v93 = vshrl.u32 %v92, 4
  %v94 = vand.u32 %v92, 15
  %v95 = vsub.s32 0, %v94
  %v96 = vsel %vm90, %v95, %v94
  %vm97 = vcmp.lt.s32.totalorder %v75, 0
  %v98 = vsub.s32 0, %v75
  %v99 = vsel %vm97, %v98, %v75
  %v100 = vshrl.u32 %v99, 4
  %v101 = vand.u32 %v99, 15
  %v102 = vsub.s32 0, %v101
  %v103 = vsel %vm97, %v102, %v101
  %vm104 = vcmp.ne.s32.totalorder %v82, 0
  %vm105 = vcmp.ne.s32.totalorder %v89, 0
  %vm106 = vcmp.ne.s32.totalorder %v96, 0
  %vm107 = vcmp.ne.s32.totalorder %v103, 0
  %vm108 = vcmp.lt.s32.totalorder %v82, 0
  %vm109 = vcmp.lt.s32.totalorder %v89, 0
  %vm110 = vcmp.lt.s32.totalorder %v96, 0
  %vm111 = vcmp.lt.s32.totalorder %v103, 0
  %vm112 = vmand %vm108, %vm104
  %vm113 = vmand %vm109, %vm105
  %vm114 = vmand %vm110, %vm106
  %vm115 = vmand %vm111, %vm107
  %v116 = vadd.s32 %v82, 16
  %v117 = vadd.s32 %v89, 16
  %v118 = vadd.s32 %v96, 16
  %v119 = vadd.s32 %v103, 16
  %v120 = vsel %vm112, %v116, %v82
  %v121 = vsel %vm113, %v117, %v89
  %v122 = vsel %vm114, %v118, %v96
  %v123 = vsel %vm115, %v119, %v103
  %vm124 = vcmp.ge.s32.totalorder %v72, 16
  %vm125 = vcmp.ge.s32.totalorder %v73, 16
  %vm126 = vcmp.ge.s32.totalorder %v74, 16
  %vm127 = vcmp.ge.s32.totalorder %v75, 16
  %vm128 = vcmp.lt.s32.totalorder %v72, 240
  %vm129 = vcmp.lt.s32.totalorder %v73, 240
  %vm130 = vcmp.lt.s32.totalorder %v74, 240
  %vm131 = vcmp.lt.s32.totalorder %v75, 240
  %vm132 = vcmp.gt.s32.totalorder %v120, 0
  %vm133 = vcmp.gt.s32.totalorder %v121, 0
  %vm134 = vcmp.gt.s32.totalorder %v122, 0
  %vm135 = vcmp.gt.s32.totalorder %v123, 0
  %vm136 = vcmp.lt.s32.totalorder %v120, 15
  %vm137 = vcmp.lt.s32.totalorder %v121, 15
  %vm138 = vcmp.lt.s32.totalorder %v122, 15
  %vm139 = vcmp.lt.s32.totalorder %v123, 15
  %vm140 = vmand %vm124, %vm132
  %vm141 = vmand %vm125, %vm133
  %vm142 = vmand %vm126, %vm134
  %vm143 = vmand %vm127, %vm135
  %vm144 = vmand %vm124, %vm136
  %vm145 = vmand %vm125, %vm137
  %vm146 = vmand %vm126, %vm138
  %vm147 = vmand %vm127, %vm139
  %vm148 = vmand %vm128, %vm132
  %vm149 = vmand %vm129, %vm133
  %vm150 = vmand %vm130, %vm134
  %vm151 = vmand %vm131, %vm135
  %vm152 = vmand %vm128, %vm136
  %vm153 = vmand %vm129, %vm137
  %vm154 = vmand %vm130, %vm138
  %vm155 = vmand %vm131, %vm139
  %v156 = vld [vmem:[%s0] sm:$0xff]
  %v158 = vcombine.high %v156, %v156
  %v160 = vunpack.c.l.s4 1983009808
  %v161 = vunpack.c.0.s8 %v160
  %v162 = vlaneseq
  %v163 = vshrl.u32 %v162, 7
  %v164 = vsub.s32 %v161, %v163
  %v165 = vrot.slane %v156, %v164
  %v167 = vunpack.c.l.s4 1983009808
  %v168 = vunpack.c.0.s8 %v167
  %v169 = vlaneseq
  %v170 = vshrl.u32 %v169, 7
  %v171 = vsub.s32 %v168, %v170
  %v172 = vrot.slane %v158, %v171
  %v173 = vcombine.high %v165, %v165
  %v174 = vcombine.high %v172, %v172
  %vm175 = vcmask 1041408
  %v178 = vsel %vm175, %v165, 0
  %v180 = vsel %vm175, %v173, 0
  %v182 = vsel %vm175, %v172, 0
  %v184 = vsel %vm175, %v174, 0
  %186 = vrot.lane.b32.xlu0 %v184, 17
  %v187 = vpop.permute.xlu0 %186
  %191 = vrot.lane.b32.xlu0 %v178, 17
  %v192 = vpop.permute.xlu0 %191
  %193 = vrot.lane.b32.xlu0 %v180, 17
  %v194 = vpop.permute.xlu0 %193
  %195 = vrot.lane.b32.xlu0 %v182, 17
  %v196 = vpop.permute.xlu0 %195
  %vm197 = vcmask 138240
  %v198 = vsel %vm197, %v192, %v194
  %v199 = vsel %vm197, %v194, %v196
  %v200 = vsel %vm197, %v196, %v187
  %vm204 = vcmask 138240
  %v207 = vsel %vm204, %v187, %v192
  %v209 = vsel %vm140, 1, 0
  %v210 = vsel %vm141, 1, 0
  %v211 = vsel %vm142, 1, 0
  %v212 = vsel %vm143, 1, 0
  %vm213 = vcmp.eq.s32.totalorder %v209, 1
  %vm214 = vcmp.eq.s32.totalorder %v210, 1
  %vm215 = vcmp.eq.s32.totalorder %v211, 1
  %vm216 = vcmp.eq.s32.totalorder %v212, 1
  %vm217 = vmpackc.low %vm214, %vm213
  %vm218 = vmpackc.low %vm216, %vm215
  %v219 = vsel %vm217, 65537, 0
  %v220 = vsel %vm218, 65537, 0
  %v221 = vlaneseq
  %v222 = vshrl.u32 %v221, 7
  %v223 = vsub.s32 0, %v222
  %v224 = vrot.slane %v219, %v223
  %v225 = vlaneseq
  %v226 = vshrl.u32 %v225, 7
  %v227 = vsub.s32 4, %v226
  %v228 = vrot.slane %v219, %v227
  %v229 = vlaneseq
  %v230 = vshrl.u32 %v229, 7
  %v231 = vsub.s32 0, %v230
  %v232 = vrot.slane %v220, %v231
  %v233 = vlaneseq
  %v234 = vshrl.u32 %v233, 7
  %v235 = vsub.s32 4, %v234
  %v236 = vrot.slane %v220, %v235
  %vm237 = vcmp.ne.s16.totalorder %v224, 0
  %vm238 = vcmp.ne.s16.totalorder %v228, 0
  %vm239 = vcmp.ne.s16.totalorder %v232, 0
  %vm240 = vcmp.ne.s16.totalorder %v236, 0
  %v241 = vsel %vm237, %v207, 0
  %v242 = vsel %vm238, %v198, 0
  %v243 = vsel %vm239, %v199, 0
  %v244 = vsel %vm240, %v200, 0
  %245 = vrot.lane.b32.xlu0 %v184, 16
  %v246 = vpop.permute.xlu0 %245
  %247 = vrot.lane.b32.xlu0 %v178, 16
  %v248 = vpop.permute.xlu0 %247
  %249 = vrot.lane.b32.xlu0 %v180, 16
  %v250 = vpop.permute.xlu0 %249
  %251 = vrot.lane.b32.xlu0 %v182, 16
  %v252 = vpop.permute.xlu0 %251
  %vm253 = vcmask 130048
  %v254 = vsel %vm253, %v248, %v250
  %v255 = vsel %vm253, %v250, %v252
  %v256 = vsel %vm253, %v252, %v246
  %vm260 = vcmask 130048
  %v263 = vsel %vm260, %v246, %v248
  %v265 = vsel %vm124, 1, 0
  %v266 = vsel %vm125, 1, 0
  %v267 = vsel %vm126, 1, 0
  %v268 = vsel %vm127, 1, 0
  %vm269 = vcmp.eq.s32.totalorder %v265, 1
  %vm270 = vcmp.eq.s32.totalorder %v266, 1
  %vm271 = vcmp.eq.s32.totalorder %v267, 1
  %vm272 = vcmp.eq.s32.totalorder %v268, 1
  %vm273 = vmpackc.low %vm270, %vm269
  %vm274 = vmpackc.low %vm272, %vm271
  %v275 = vsel %vm273, 65537, 0
  %v276 = vsel %vm274, 65537, 0
  %v277 = vlaneseq
  %v278 = vshrl.u32 %v277, 7
  %v279 = vsub.s32 0, %v278
  %v280 = vrot.slane %v275, %v279
  %v281 = vlaneseq
  %v282 = vshrl.u32 %v281, 7
  %v283 = vsub.s32 4, %v282
  %v284 = vrot.slane %v275, %v283
  %v285 = vlaneseq
  %v286 = vshrl.u32 %v285, 7
  %v287 = vsub.s32 0, %v286
  %v288 = vrot.slane %v276, %v287
  %v289 = vlaneseq
  %v290 = vshrl.u32 %v289, 7
  %v291 = vsub.s32 4, %v290
  %v292 = vrot.slane %v276, %v291
  %vm293 = vcmp.ne.s16.totalorder %v280, 0
  %vm294 = vcmp.ne.s16.totalorder %v284, 0
  %vm295 = vcmp.ne.s16.totalorder %v288, 0
  %vm296 = vcmp.ne.s16.totalorder %v292, 0
  %v297 = vsel %vm293, %v263, 0
  %v298 = vsel %vm294, %v254, 0
  %v299 = vsel %vm295, %v255, 0
  %v300 = vsel %vm296, %v256, 0
  %301 = vrot.lane.b32.xlu0 %v184, 15
  %v302 = vpop.permute.xlu0 %301
  %303 = vrot.lane.b32.xlu0 %v178, 15
  %v304 = vpop.permute.xlu0 %303
  %305 = vrot.lane.b32.xlu0 %v180, 15
  %v306 = vpop.permute.xlu0 %305
  %307 = vrot.lane.b32.xlu0 %v182, 15
  %v308 = vpop.permute.xlu0 %307
  %vm309 = vcmask 121856
  %v310 = vsel %vm309, %v304, %v306
  %v311 = vsel %vm309, %v306, %v308
  %v312 = vsel %vm309, %v308, %v302
  %vm316 = vcmask 121856
  %v319 = vsel %vm316, %v302, %v304
  %v321 = vsel %vm144, 1, 0
  %v322 = vsel %vm145, 1, 0
  %v323 = vsel %vm146, 1, 0
  %v324 = vsel %vm147, 1, 0
  %vm325 = vcmp.eq.s32.totalorder %v321, 1
  %vm326 = vcmp.eq.s32.totalorder %v322, 1
  %vm327 = vcmp.eq.s32.totalorder %v323, 1
  %vm328 = vcmp.eq.s32.totalorder %v324, 1
  %vm329 = vmpackc.low %vm326, %vm325
  %vm330 = vmpackc.low %vm328, %vm327
  %v331 = vsel %vm329, 65537, 0
  %v332 = vsel %vm330, 65537, 0
  %v333 = vlaneseq
  %v334 = vshrl.u32 %v333, 7
  %v335 = vsub.s32 0, %v334
  %v336 = vrot.slane %v331, %v335
  %v337 = vlaneseq
  %v338 = vshrl.u32 %v337, 7
  %v339 = vsub.s32 4, %v338
  %v340 = vrot.slane %v331, %v339
  %v341 = vlaneseq
  %v342 = vshrl.u32 %v341, 7
  %v343 = vsub.s32 0, %v342
  %v344 = vrot.slane %v332, %v343
  %v345 = vlaneseq
  %v346 = vshrl.u32 %v345, 7
  %v347 = vsub.s32 4, %v346
  %v348 = vrot.slane %v332, %v347
  %vm349 = vcmp.ne.s16.totalorder %v336, 0
  %vm350 = vcmp.ne.s16.totalorder %v340, 0
  %vm351 = vcmp.ne.s16.totalorder %v344, 0
  %vm352 = vcmp.ne.s16.totalorder %v348, 0
  %v353 = vsel %vm349, %v319, 0
  %v354 = vsel %vm350, %v310, 0
  %v355 = vsel %vm351, %v311, 0
  %v356 = vsel %vm352, %v312, 0
  %357 = vrot.lane.b32.xlu0 %v184, 1
  %v358 = vpop.permute.xlu0 %357
  %359 = vrot.lane.b32.xlu0 %v178, 1
  %v360 = vpop.permute.xlu0 %359
  %361 = vrot.lane.b32.xlu0 %v180, 1
  %v362 = vpop.permute.xlu0 %361
  %363 = vrot.lane.b32.xlu0 %v182, 1
  %v364 = vpop.permute.xlu0 %363
  %vm365 = vcmask 7168
  %v366 = vsel %vm365, %v360, %v362
  %v367 = vsel %vm365, %v362, %v364
  %v368 = vsel %vm365, %v364, %v358
  %vm372 = vcmask 7168
  %v375 = vsel %vm372, %v358, %v360
  %v377 = vsel %vm132, 1, 0
  %v378 = vsel %vm133, 1, 0
  %v379 = vsel %vm134, 1, 0
  %v380 = vsel %vm135, 1, 0
  %vm381 = vcmp.eq.s32.totalorder %v377, 1
  %vm382 = vcmp.eq.s32.totalorder %v378, 1
  %vm383 = vcmp.eq.s32.totalorder %v379, 1
  %vm384 = vcmp.eq.s32.totalorder %v380, 1
  %vm385 = vmpackc.low %vm382, %vm381
  %vm386 = vmpackc.low %vm384, %vm383
  %v387 = vsel %vm385, 65537, 0
  %v388 = vsel %vm386, 65537, 0
  %v389 = vlaneseq
  %v390 = vshrl.u32 %v389, 7
  %v391 = vsub.s32 0, %v390
  %v392 = vrot.slane %v387, %v391
  %v393 = vlaneseq
  %v394 = vshrl.u32 %v393, 7
  %v395 = vsub.s32 4, %v394
  %v396 = vrot.slane %v387, %v395
  %v397 = vlaneseq
  %v398 = vshrl.u32 %v397, 7
  %v399 = vsub.s32 0, %v398
  %v400 = vrot.slane %v388, %v399
  %v401 = vlaneseq
  %v402 = vshrl.u32 %v401, 7
  %v403 = vsub.s32 4, %v402
  %v404 = vrot.slane %v388, %v403
  %vm405 = vcmp.ne.s16.totalorder %v392, 0
  %vm406 = vcmp.ne.s16.totalorder %v396, 0
  %vm407 = vcmp.ne.s16.totalorder %v400, 0
  %vm408 = vcmp.ne.s16.totalorder %v404, 0
  %v409 = vsel %vm405, %v375, 0
  %v410 = vsel %vm406, %v366, 0
  %v411 = vsel %vm407, %v367, 0
  %v412 = vsel %vm408, %v368, 0
  %413 = vrot.lane.b32.xlu0 %v178, 127
  %v414 = vpop.permute.xlu0 %413
  %415 = vrot.lane.b32.xlu0 %v180, 127
  %v416 = vpop.permute.xlu0 %415
  %417 = vrot.lane.b32.xlu0 %v182, 127
  %v418 = vpop.permute.xlu0 %417
  %419 = vrot.lane.b32.xlu0 %v184, 127
  %v420 = vpop.permute.xlu0 %419
  %vm421 = vcmask 1039360
  %v422 = vsel %vm421, %v414, %v416
  %v423 = vsel %vm421, %v416, %v418
  %v424 = vsel %vm421, %v418, %v420
  %vm428 = vcmask 1039360
  %v431 = vsel %vm428, %v420, %v414
  %v433 = vsel %vm136, 1, 0
  %v434 = vsel %vm137, 1, 0
  %v435 = vsel %vm138, 1, 0
  %v436 = vsel %vm139, 1, 0
  %vm437 = vcmp.eq.s32.totalorder %v433, 1
  %vm438 = vcmp.eq.s32.totalorder %v434, 1
  %vm439 = vcmp.eq.s32.totalorder %v435, 1
  %vm440 = vcmp.eq.s32.totalorder %v436, 1
  %vm441 = vmpackc.low %vm438, %vm437
  %vm442 = vmpackc.low %vm440, %vm439
  %v443 = vsel %vm441, 65537, 0
  %v444 = vsel %vm442, 65537, 0
  %v445 = vlaneseq
  %v446 = vshrl.u32 %v445, 7
  %v447 = vsub.s32 0, %v446
  %v448 = vrot.slane %v443, %v447
  %v449 = vlaneseq
  %v450 = vshrl.u32 %v449, 7
  %v451 = vsub.s32 4, %v450
  %v452 = vrot.slane %v443, %v451
  %v453 = vlaneseq
  %v454 = vshrl.u32 %v453, 7
  %v455 = vsub.s32 0, %v454
  %v456 = vrot.slane %v444, %v455
  %v457 = vlaneseq
  %v458 = vshrl.u32 %v457, 7
  %v459 = vsub.s32 4, %v458
  %v460 = vrot.slane %v444, %v459
  %vm461 = vcmp.ne.s16.totalorder %v448, 0
  %vm462 = vcmp.ne.s16.totalorder %v452, 0
  %vm463 = vcmp.ne.s16.totalorder %v456, 0
  %vm464 = vcmp.ne.s16.totalorder %v460, 0
  %v465 = vsel %vm461, %v422, 0
  %v466 = vsel %vm462, %v423, 0
  %v467 = vsel %vm463, %v424, 0
  %v468 = vsel %vm464, %v431, 0
  %469 = vrot.lane.b32.xlu0 %v178, 113
  %v470 = vpop.permute.xlu0 %469
  %471 = vrot.lane.b32.xlu0 %v180, 113
  %v472 = vpop.permute.xlu0 %471
  %473 = vrot.lane.b32.xlu0 %v182, 113
  %v474 = vpop.permute.xlu0 %473
  %475 = vrot.lane.b32.xlu0 %v184, 113
  %v476 = vpop.permute.xlu0 %475
  %vm477 = vcmask 924672
  %v478 = vsel %vm477, %v470, %v472
  %v479 = vsel %vm477, %v472, %v474
  %v480 = vsel %vm477, %v474, %v476
  %vm484 = vcmask 924672
  %v487 = vsel %vm484, %v476, %v470
  %v489 = vsel %vm148, 1, 0
  %v490 = vsel %vm149, 1, 0
  %v491 = vsel %vm150, 1, 0
  %v492 = vsel %vm151, 1, 0
  %vm493 = vcmp.eq.s32.totalorder %v489, 1
  %vm494 = vcmp.eq.s32.totalorder %v490, 1
  %vm495 = vcmp.eq.s32.totalorder %v491, 1
  %vm496 = vcmp.eq.s32.totalorder %v492, 1
  %vm497 = vmpackc.low %vm494, %vm493
  %vm498 = vmpackc.low %vm496, %vm495
  %v499 = vsel %vm497, 65537, 0
  %v500 = vsel %vm498, 65537, 0
  %v501 = vlaneseq
  %v502 = vshrl.u32 %v501, 7
  %v503 = vsub.s32 0, %v502
  %v504 = vrot.slane %v499, %v503
  %v505 = vlaneseq
  %v506 = vshrl.u32 %v505, 7
  %v507 = vsub.s32 4, %v506
  %v508 = vrot.slane %v499, %v507
  %v509 = vlaneseq
  %v510 = vshrl.u32 %v509, 7
  %v511 = vsub.s32 0, %v510
  %v512 = vrot.slane %v500, %v511
  %v513 = vlaneseq
  %v514 = vshrl.u32 %v513, 7
  %v515 = vsub.s32 4, %v514
  %v516 = vrot.slane %v500, %v515
  %vm517 = vcmp.ne.s16.totalorder %v504, 0
  %vm518 = vcmp.ne.s16.totalorder %v508, 0
  %vm519 = vcmp.ne.s16.totalorder %v512, 0
  %vm520 = vcmp.ne.s16.totalorder %v516, 0
  %v521 = vsel %vm517, %v478, 0
  %v522 = vsel %vm518, %v479, 0
  %v523 = vsel %vm519, %v480, 0
  %v524 = vsel %vm520, %v487, 0
  %525 = vrot.lane.b32.xlu0 %v178, 112
  %v526 = vpop.permute.xlu0 %525
  %527 = vrot.lane.b32.xlu0 %v180, 112
  %v528 = vpop.permute.xlu0 %527
  %529 = vrot.lane.b32.xlu0 %v182, 112
  %v530 = vpop.permute.xlu0 %529
  %531 = vrot.lane.b32.xlu0 %v184, 112
  %v532 = vpop.permute.xlu0 %531
  %vm533 = vcmask 916480
  %v534 = vsel %vm533, %v526, %v528
  %v535 = vsel %vm533, %v528, %v530
  %v536 = vsel %vm533, %v530, %v532
  %vm540 = vcmask 916480
  %v543 = vsel %vm540, %v532, %v526
  %v545 = vsel %vm128, 1, 0
  %v546 = vsel %vm129, 1, 0
  %v547 = vsel %vm130, 1, 0
  %v548 = vsel %vm131, 1, 0
  %vm549 = vcmp.eq.s32.totalorder %v545, 1
  %vm550 = vcmp.eq.s32.totalorder %v546, 1
  %vm551 = vcmp.eq.s32.totalorder %v547, 1
  %vm552 = vcmp.eq.s32.totalorder %v548, 1
  %vm553 = vmpackc.low %vm550, %vm549
  %vm554 = vmpackc.low %vm552, %vm551
  %v555 = vsel %vm553, 65537, 0
  %v556 = vsel %vm554, 65537, 0
  %v557 = vlaneseq
  %v558 = vshrl.u32 %v557, 7
  %v559 = vsub.s32 0, %v558
  %v560 = vrot.slane %v555, %v559
  %v561 = vlaneseq
  %v562 = vshrl.u32 %v561, 7
  %v563 = vsub.s32 4, %v562
  %v564 = vrot.slane %v555, %v563
  %v565 = vlaneseq
  %v566 = vshrl.u32 %v565, 7
  %v567 = vsub.s32 0, %v566
  %v568 = vrot.slane %v556, %v567
  %v569 = vlaneseq
  %v570 = vshrl.u32 %v569, 7
  %v571 = vsub.s32 4, %v570
  %v572 = vrot.slane %v556, %v571
  %vm573 = vcmp.ne.s16.totalorder %v560, 0
  %vm574 = vcmp.ne.s16.totalorder %v564, 0
  %vm575 = vcmp.ne.s16.totalorder %v568, 0
  %vm576 = vcmp.ne.s16.totalorder %v572, 0
  %v577 = vsel %vm573, %v534, 0
  %v578 = vsel %vm574, %v535, 0
  %v579 = vsel %vm575, %v536, 0
  %v580 = vsel %vm576, %v543, 0
  %581 = vrot.lane.b32.xlu0 %v178, 111
  %v582 = vpop.permute.xlu0 %581
  %583 = vrot.lane.b32.xlu0 %v180, 111
  %v584 = vpop.permute.xlu0 %583
  %585 = vrot.lane.b32.xlu0 %v182, 111
  %v586 = vpop.permute.xlu0 %585
  %587 = vrot.lane.b32.xlu0 %v184, 111
  %v588 = vpop.permute.xlu0 %587
  %vm589 = vcmask 908288
  %v590 = vsel %vm589, %v582, %v584
  %v591 = vsel %vm589, %v584, %v586
  %v592 = vsel %vm589, %v586, %v588
  %vm596 = vcmask 908288
  %v599 = vsel %vm596, %v588, %v582
  %v601 = vsel %vm152, 1, 0
  %v602 = vsel %vm153, 1, 0
  %v603 = vsel %vm154, 1, 0
  %v604 = vsel %vm155, 1, 0
  %vm605 = vcmp.eq.s32.totalorder %v601, 1
  %vm606 = vcmp.eq.s32.totalorder %v602, 1
  %vm607 = vcmp.eq.s32.totalorder %v603, 1
  %vm608 = vcmp.eq.s32.totalorder %v604, 1
  %vm609 = vmpackc.low %vm606, %vm605
  %vm610 = vmpackc.low %vm608, %vm607
  %v611 = vsel %vm609, 65537, 0
  %v612 = vsel %vm610, 65537, 0
  %v613 = vlaneseq
  %v614 = vshrl.u32 %v613, 7
  %v615 = vsub.s32 0, %v614
  %v616 = vrot.slane %v611, %v615
  %v617 = vlaneseq
  %v618 = vshrl.u32 %v617, 7
  %v619 = vsub.s32 4, %v618
  %v620 = vrot.slane %v611, %v619
  %v621 = vlaneseq
  %v622 = vshrl.u32 %v621, 7
  %v623 = vsub.s32 0, %v622
  %v624 = vrot.slane %v612, %v623
  %v625 = vlaneseq
  %v626 = vshrl.u32 %v625, 7
  %v627 = vsub.s32 4, %v626
  %v628 = vrot.slane %v612, %v627
  %vm629 = vcmp.ne.s16.totalorder %v616, 0
  %vm630 = vcmp.ne.s16.totalorder %v620, 0
  %vm631 = vcmp.ne.s16.totalorder %v624, 0
  %vm632 = vcmp.ne.s16.totalorder %v628, 0
  %v633 = vsel %vm629, %v590, 0
  %v634 = vsel %vm630, %v591, 0
  %v635 = vsel %vm631, %v592, 0
  %v636 = vsel %vm632, %v599, 0
  %v641 = vrot.slane %v297, 4
  %v642 = vrot.slane %v298, 4
  %v643 = vrot.slane %v299, 4
  %v644 = vrot.slane %v300, 4
  %v649 = vrot.slane %v409, 4
  %v650 = vrot.slane %v410, 4
  %v651 = vrot.slane %v411, 4
  %v652 = vrot.slane %v412, 4
  %v657 = vrot.slane %v465, 4
  %v658 = vrot.slane %v466, 4
  %v659 = vrot.slane %v467, 4
  %v660 = vrot.slane %v468, 4
  %v665 = vrot.slane %v577, 4
  %v666 = vrot.slane %v578, 4
  %v667 = vrot.slane %v579, 4
  %v668 = vrot.slane %v580, 4
  %vm669 = vcmask 1043456
  %v672 = vsel %vm669, %v241, %v641
  %v676 = vsel %vm669, %v242, %v642
  %v680 = vsel %vm669, %v243, %v643
  %v684 = vsel %vm669, %v244, %v644
  %v688 = vsel %vm669, %v353, %v649
  %v692 = vsel %vm669, %v354, %v650
  %v696 = vsel %vm669, %v355, %v651
  %v700 = vsel %vm669, %v356, %v652
  %v703 = vsel %vm669, %v178, %v657
  %v706 = vsel %vm669, %v180, %v658
  %v709 = vsel %vm669, %v182, %v659
  %v712 = vsel %vm669, %v184, %v660
  %v716 = vsel %vm669, %v521, %v665
  %v720 = vsel %vm669, %v522, %v666
  %v724 = vsel %vm669, %v523, %v667
  %v728 = vsel %vm669, %v524, %v668
  %v730 = vld [vmem:[%s1] sm:$0xf]
  %v731 = vld [vmem:[%s2] sm:$0xff]
  %733 = vset.pattern.permute.xlu0 0
  %734 = vperm.xlu0 %733, %v731
  %v735 = vpop.permute.xlu0 %734
  %vm737 = vcmask 588800
  %v739 = vsel %vm737, %v730, 0
  %v742 = vsel %vm669, %v633, 0
  %v745 = vsel %vm669, %v634, 0
  %v748 = vsel %vm669, %v635, 0
  %v751 = vsel %vm669, %v636, 0
  %753 = vmatprep.subr.bf16.mxu0 %v676
  %754 = vmatpush1.bf16.msra.mxu0 %v672
  %755 = vmatprep.subr.bf16.mxu0 %v692
  %756 = vmatpush1.bf16.msra.mxu0 %v688
  %757 = vmatprep.subr.bf16.mxu0 %v706
  %758 = vmatpush1.bf16.msra.mxu0 %v703
  %759 = vmatprep.subr.bf16.mxu0 %v720
  %760 = vmatpush1.bf16.msra.mxu0 %v716
  %761 = vmatprep.subr.bf16.mxu0 %v745
  %762 = vmatpush1.bf16.msra.mxu0 %v742
  %763 = vmatprep.subr.bf16.mxu0 0
  %764 = vmatpush1.bf16.msra.mxu0 0
  %765 = vmatprep.subr.bf16.mxu0 0
  %766 = vmatpush1.bf16.msra.mxu0 0
  %767 = vmatprep.subr.bf16.mxu0 0
  %768 = vmatpush1.bf16.msra.mxu0 0
  %769 = vmatprep.subr.bf16.mxu0 0
  %770 = vmatpush1.bf16.msra.mxu0 0
  %771 = vmatprep.subr.bf16.mxu0 0
  %772 = vmatpush1.bf16.msra.mxu0 0
  %773 = vmatprep.subr.bf16.mxu0 0
  %774 = vmatpush1.bf16.msra.mxu0 0
  %775 = vmatprep.subr.bf16.mxu0 0
  %776 = vmatpush1.bf16.msra.mxu0 0
  %777 = vmatprep.subr.bf16.mxu0 0
  %778 = vmatpush1.bf16.msra.mxu0 0
  %779 = vmatprep.subr.bf16.mxu0 0
  %780 = vmatpush1.bf16.msra.mxu0 0
  %781 = vmatprep.subr.bf16.mxu0 0
  %782 = vmatpush1.bf16.msra.mxu0 0
  %783 = vmatprep.subr.bf16.mxu0 0
  %784 = vmatpush1.bf16.msra.mxu0 0
  %785 = vmatprep.mubr.bf16.mxu0 0
  %786 = vmatmul.mubr.bf16.gmra.mrb[0].mxu0 %v739
  %v787 = vpop.f32.mrb[0].mxu0
  %v788 = vadd.f32 %v735, %v787
  %v789 = vpop.f32.mrb[0].mxu0
  %v790 = vadd.f32 %v735, %v789
  %v791 = vpop.f32.mrb[0].mxu0
  %v792 = vpop.f32.mrb[0].mxu0
  %793 = vdwg.mxu0
  %794 = vmatprep.subr.bf16.mxu0 %v684
  %795 = vmatpush1.bf16.msra.mxu0 %v680
  %796 = vmatprep.subr.bf16.mxu0 %v700
  %797 = vmatpush1.bf16.msra.mxu0 %v696
  %798 = vmatprep.subr.bf16.mxu0 %v712
  %799 = vmatpush1.bf16.msra.mxu0 %v709
  %800 = vmatprep.subr.bf16.mxu0 %v728
  %801 = vmatpush1.bf16.msra.mxu0 %v724
  %802 = vmatprep.subr.bf16.mxu0 %v751
  %803 = vmatpush1.bf16.msra.mxu0 %v748
  %804 = vmatprep.subr.bf16.mxu0 0
  %805 = vmatpush1.bf16.msra.mxu0 0
  %806 = vmatprep.subr.bf16.mxu0 0
  %807 = vmatpush1.bf16.msra.mxu0 0
  %808 = vmatprep.subr.bf16.mxu0 0
  %809 = vmatpush1.bf16.msra.mxu0 0
  %810 = vmatprep.subr.bf16.mxu0 0
  %811 = vmatpush1.bf16.msra.mxu0 0
  %812 = vmatprep.subr.bf16.mxu0 0
  %813 = vmatpush1.bf16.msra.mxu0 0
  %814 = vmatprep.subr.bf16.mxu0 0
  %815 = vmatpush1.bf16.msra.mxu0 0
  %816 = vmatprep.subr.bf16.mxu0 0
  %817 = vmatpush1.bf16.msra.mxu0 0
  %818 = vmatprep.subr.bf16.mxu0 0
  %819 = vmatpush1.bf16.msra.mxu0 0
  %820 = vmatprep.subr.bf16.mxu0 0
  %821 = vmatpush1.bf16.msra.mxu0 0
  %822 = vmatprep.subr.bf16.mxu0 0
  %823 = vmatpush1.bf16.msra.mxu0 0
  %824 = vmatprep.subr.bf16.mxu0 0
  %825 = vmatpush1.bf16.msra.mxu0 0
  %826 = vmatprep.mubr.bf16.mxu0 0
  %827 = vmatmul.mubr.bf16.gmra.mrb[0].mxu0 %v739
  %v828 = vpop.f32.mrb[0].mxu0
  %v829 = vadd.f32 %v735, %v828
  %v830 = vpop.f32.mrb[0].mxu0
  %v831 = vadd.f32 %v735, %v830
  %v832 = vpop.f32.mrb[0].mxu0
  %v833 = vpop.f32.mrb[0].mxu0
  %834 = vdwg.mxu0
  %v835 = vmax.f32 %v788, 0.0
  %v836 = vmax.f32 %v790, 0.0
  %v837 = vmax.f32 %v829, 0.0
  %v838 = vmax.f32 %v831, 0.0
  %v839 = vpack.c.bf16 %v835, %v835
  %v840 = vpack.c.bf16 %v836, %v836
  %v841 = vpack.c.bf16 %v837, %v837
  %v842 = vpack.c.bf16 %v838, %v838
  %844 = vrot.lane.b32.xlu0 %v842, 17
  %v845 = vpop.permute.xlu0 %844
  %849 = vrot.lane.b32.xlu0 %v839, 17
  %v850 = vpop.permute.xlu0 %849
  %851 = vrot.lane.b32.xlu0 %v840, 17
  %v852 = vpop.permute.xlu0 %851
  %853 = vrot.lane.b32.xlu0 %v841, 17
  %v854 = vpop.permute.xlu0 %853
  %v855 = vsel %vm197, %v850, %v852
  %v856 = vsel %vm197, %v852, %v854
  %v857 = vsel %vm197, %v854, %v845
  %v863 = vsel %vm204, %v845, %v850
  %v865 = vsel %vm237, %v863, 0
  %v866 = vsel %vm238, %v855, 0
  %v867 = vsel %vm239, %v856, 0
  %v868 = vsel %vm240, %v857, 0
  %869 = vrot.lane.b32.xlu0 %v842, 16
  %v870 = vpop.permute.xlu0 %869
  %871 = vrot.lane.b32.xlu0 %v839, 16
  %v872 = vpop.permute.xlu0 %871
  %873 = vrot.lane.b32.xlu0 %v840, 16
  %v874 = vpop.permute.xlu0 %873
  %875 = vrot.lane.b32.xlu0 %v841, 16
  %v876 = vpop.permute.xlu0 %875
  %v877 = vsel %vm253, %v872, %v874
  %v878 = vsel %vm253, %v874, %v876
  %v879 = vsel %vm253, %v876, %v870
  %v885 = vsel %vm260, %v870, %v872
  %v887 = vsel %vm293, %v885, 0
  %v888 = vsel %vm294, %v877, 0
  %v889 = vsel %vm295, %v878, 0
  %v890 = vsel %vm296, %v879, 0
  %891 = vrot.lane.b32.xlu0 %v842, 15
  %v892 = vpop.permute.xlu0 %891
  %893 = vrot.lane.b32.xlu0 %v839, 15
  %v894 = vpop.permute.xlu0 %893
  %895 = vrot.lane.b32.xlu0 %v840, 15
  %v896 = vpop.permute.xlu0 %895
  %897 = vrot.lane.b32.xlu0 %v841, 15
  %v898 = vpop.permute.xlu0 %897
  %v899 = vsel %vm309, %v894, %v896
  %v900 = vsel %vm309, %v896, %v898
  %v901 = vsel %vm309, %v898, %v892
  %v907 = vsel %vm316, %v892, %v894
  %v909 = vsel %vm349, %v907, 0
  %v910 = vsel %vm350, %v899, 0
  %v911 = vsel %vm351, %v900, 0
  %v912 = vsel %vm352, %v901, 0
  %913 = vrot.lane.b32.xlu0 %v842, 1
  %v914 = vpop.permute.xlu0 %913
  %915 = vrot.lane.b32.xlu0 %v839, 1
  %v916 = vpop.permute.xlu0 %915
  %917 = vrot.lane.b32.xlu0 %v840, 1
  %v918 = vpop.permute.xlu0 %917
  %919 = vrot.lane.b32.xlu0 %v841, 1
  %v920 = vpop.permute.xlu0 %919
  %v921 = vsel %vm365, %v916, %v918
  %v922 = vsel %vm365, %v918, %v920
  %v923 = vsel %vm365, %v920, %v914
  %v929 = vsel %vm372, %v914, %v916
  %v931 = vsel %vm405, %v929, 0
  %v932 = vsel %vm406, %v921, 0
  %v933 = vsel %vm407, %v922, 0
  %v934 = vsel %vm408, %v923, 0
  %935 = vrot.lane.b32.xlu0 %v839, 127
  %v936 = vpop.permute.xlu0 %935
  %937 = vrot.lane.b32.xlu0 %v840, 127
  %v938 = vpop.permute.xlu0 %937
  %939 = vrot.lane.b32.xlu0 %v841, 127
  %v940 = vpop.permute.xlu0 %939
  %941 = vrot.lane.b32.xlu0 %v842, 127
  %v942 = vpop.permute.xlu0 %941
  %v943 = vsel %vm421, %v936, %v938
  %v944 = vsel %vm421, %v938, %v940
  %v945 = vsel %vm421, %v940, %v942
  %v951 = vsel %vm428, %v942, %v936
  %v953 = vsel %vm461, %v943, 0
  %v954 = vsel %vm462, %v944, 0
  %v955 = vsel %vm463, %v945, 0
  %v956 = vsel %vm464, %v951, 0
  %957 = vrot.lane.b32.xlu0 %v839, 113
  %v958 = vpop.permute.xlu0 %957
  %959 = vrot.lane.b32.xlu0 %v840, 113
  %v960 = vpop.permute.xlu0 %959
  %961 = vrot.lane.b32.xlu0 %v841, 113
  %v962 = vpop.permute.xlu0 %961
  %963 = vrot.lane.b32.xlu0 %v842, 113
  %v964 = vpop.permute.xlu0 %963
  %v965 = vsel %vm477, %v958, %v960
  %v966 = vsel %vm477, %v960, %v962
  %v967 = vsel %vm477, %v962, %v964
  %v973 = vsel %vm484, %v964, %v958
  %v975 = vsel %vm517, %v965, 0
  %v976 = vsel %vm518, %v966, 0
  %v977 = vsel %vm519, %v967, 0
  %v978 = vsel %vm520, %v973, 0
  %979 = vrot.lane.b32.xlu0 %v839, 112
  %v980 = vpop.permute.xlu0 %979
  %981 = vrot.lane.b32.xlu0 %v840, 112
  %v982 = vpop.permute.xlu0 %981
  %983 = vrot.lane.b32.xlu0 %v841, 112
  %v984 = vpop.permute.xlu0 %983
  %985 = vrot.lane.b32.xlu0 %v842, 112
  %v986 = vpop.permute.xlu0 %985
  %v987 = vsel %vm533, %v980, %v982
  %v988 = vsel %vm533, %v982, %v984
  %v989 = vsel %vm533, %v984, %v986
  %v995 = vsel %vm540, %v986, %v980
  %v997 = vsel %vm573, %v987, 0
  %v998 = vsel %vm574, %v988, 0
  %v999 = vsel %vm575, %v989, 0
  %v1000 = vsel %vm576, %v995, 0
  %1001 = vrot.lane.b32.xlu0 %v839, 111
  %v1002 = vpop.permute.xlu0 %1001
  %1003 = vrot.lane.b32.xlu0 %v840, 111
  %v1004 = vpop.permute.xlu0 %1003
  %1005 = vrot.lane.b32.xlu0 %v841, 111
  %v1006 = vpop.permute.xlu0 %1005
  %1007 = vrot.lane.b32.xlu0 %v842, 111
  %v1008 = vpop.permute.xlu0 %1007
  %v1009 = vsel %vm589, %v1002, %v1004
  %v1010 = vsel %vm589, %v1004, %v1006
  %v1011 = vsel %vm589, %v1006, %v1008
  %v1017 = vsel %vm596, %v1008, %v1002
  %v1019 = vsel %vm629, %v1009, 0
  %v1020 = vsel %vm630, %v1010, 0
  %v1021 = vsel %vm631, %v1011, 0
  %v1022 = vsel %vm632, %v1017, 0
  %v1027 = vrot.slane %v887, 4
  %v1028 = vrot.slane %v888, 4
  %v1029 = vrot.slane %v889, 4
  %v1030 = vrot.slane %v890, 4
  %v1035 = vrot.slane %v931, 4
  %v1036 = vrot.slane %v932, 4
  %v1037 = vrot.slane %v933, 4
  %v1038 = vrot.slane %v934, 4
  %v1043 = vrot.slane %v953, 4
  %v1044 = vrot.slane %v954, 4
  %v1045 = vrot.slane %v955, 4
  %v1046 = vrot.slane %v956, 4
  %v1051 = vrot.slane %v997, 4
  %v1052 = vrot.slane %v998, 4
  %v1053 = vrot.slane %v999, 4
  %v1054 = vrot.slane %v1000, 4
  %v1057 = vsel %vm669, %v865, %v1027
  %v1061 = vsel %vm669, %v866, %v1028
  %v1065 = vsel %vm669, %v867, %v1029
  %v1069 = vsel %vm669, %v868, %v1030
  %v1073 = vsel %vm669, %v909, %v1035
  %v1077 = vsel %vm669, %v910, %v1036
  %v1081 = vsel %vm669, %v911, %v1037
  %v1085 = vsel %vm669, %v912, %v1038
  %v1089 = vsel %vm669, %v839, %v1043
  %v1093 = vsel %vm669, %v840, %v1044
  %v1097 = vsel %vm669, %v841, %v1045
  %v1101 = vsel %vm669, %v842, %v1046
  %v1105 = vsel %vm669, %v975, %v1051
  %v1109 = vsel %vm669, %v976, %v1052
  %v1113 = vsel %vm669, %v977, %v1053
  %v1117 = vsel %vm669, %v978, %v1054
  %v1119 = vld [vmem:[%s3] sm:$0x3]
  %v1120 = vld [vmem:[%s4] sm:$0xf]
  %1122 = vset.pattern.permute.xlu0 0
  %1123 = vperm.xlu0 %1122, %v1120
  %v1124 = vpop.permute.xlu0 %1123
  %v1127 = vsel %vm737, %v1119, 0
  %v1130 = vsel %vm669, %v1019, 0
  %v1133 = vsel %vm669, %v1020, 0
  %v1136 = vsel %vm669, %v1021, 0
  %v1139 = vsel %vm669, %v1022, 0
  %1141 = vmatprep.subr.bf16.mxu0 %v1061
  %1142 = vmatpush1.bf16.msra.mxu0 %v1057
  %1143 = vmatprep.subr.bf16.mxu0 %v1077
  %1144 = vmatpush1.bf16.msra.mxu0 %v1073
  %1145 = vmatprep.subr.bf16.mxu0 %v1093
  %1146 = vmatpush1.bf16.msra.mxu0 %v1089
  %1147 = vmatprep.subr.bf16.mxu0 %v1109
  %1148 = vmatpush1.bf16.msra.mxu0 %v1105
  %1149 = vmatprep.subr.bf16.mxu0 %v1133
  %1150 = vmatpush1.bf16.msra.mxu0 %v1130
  %1151 = vmatprep.subr.bf16.mxu0 0
  %1152 = vmatpush1.bf16.msra.mxu0 0
  %1153 = vmatprep.subr.bf16.mxu0 0
  %1154 = vmatpush1.bf16.msra.mxu0 0
  %1155 = vmatprep.subr.bf16.mxu0 0
  %1156 = vmatpush1.bf16.msra.mxu0 0
  %1157 = vmatprep.subr.bf16.mxu0 0
  %1158 = vmatpush1.bf16.msra.mxu0 0
  %1159 = vmatprep.subr.bf16.mxu0 0
  %1160 = vmatpush1.bf16.msra.mxu0 0
  %1161 = vmatprep.subr.bf16.mxu0 0
  %1162 = vmatpush1.bf16.msra.mxu0 0
  %1163 = vmatprep.subr.bf16.mxu0 0
  %1164 = vmatpush1.bf16.msra.mxu0 0
  %1165 = vmatprep.subr.bf16.mxu0 0
  %1166 = vmatpush1.bf16.msra.mxu0 0
  %1167 = vmatprep.subr.bf16.mxu0 0
  %1168 = vmatpush1.bf16.msra.mxu0 0
  %1169 = vmatprep.subr.bf16.mxu0 0
  %1170 = vmatpush1.bf16.msra.mxu0 0
  %1171 = vmatprep.subr.bf16.mxu0 0
  %1172 = vmatpush1.bf16.msra.mxu0 0
  %1173 = vmatprep.mubr.bf16.mxu0 0
  %1174 = vmatmul.mubr.bf16.gmra.mrb[0].mxu0 %v1127
  %v1175 = vpop.f32.mrb[0].mxu0
  %v1176 = vadd.f32 %v1124, %v1175
  %v1177 = vpop.f32.mrb[0].mxu0
  %v1178 = vadd.f32 %v1124, %v1177
  %v1179 = vpop.f32.mrb[0].mxu0
  %v1180 = vpop.f32.mrb[0].mxu0
  %1181 = vdwg.mxu0
  %1182 = vmatprep.subr.bf16.mxu0 %v1069
  %1183 = vmatpush1.bf16.msra.mxu0 %v1065
  %1184 = vmatprep.subr.bf16.mxu0 %v1085
  %1185 = vmatpush1.bf16.msra.mxu0 %v1081
  %1186 = vmatprep.subr.bf16.mxu0 %v1101
  %1187 = vmatpush1.bf16.msra.mxu0 %v1097
  %1188 = vmatprep.subr.bf16.mxu0 %v1117
  %1189 = vmatpush1.bf16.msra.mxu0 %v1113
  %1190 = vmatprep.subr.bf16.mxu0 %v1139
  %1191 = vmatpush1.bf16.msra.mxu0 %v1136
  %1192 = vmatprep.subr.bf16.mxu0 0
  %1193 = vmatpush1.bf16.msra.mxu0 0
  %1194 = vmatprep.subr.bf16.mxu0 0
  %1195 = vmatpush1.bf16.msra.mxu0 0
  %1196 = vmatprep.subr.bf16.mxu0 0
  %1197 = vmatpush1.bf16.msra.mxu0 0
  %1198 = vmatprep.subr.bf16.mxu0 0
  %1199 = vmatpush1.bf16.msra.mxu0 0
  %1200 = vmatprep.subr.bf16.mxu0 0
  %1201 = vmatpush1.bf16.msra.mxu0 0
  %1202 = vmatprep.subr.bf16.mxu0 0
  %1203 = vmatpush1.bf16.msra.mxu0 0
  %1204 = vmatprep.subr.bf16.mxu0 0
  %1205 = vmatpush1.bf16.msra.mxu0 0
  %1206 = vmatprep.subr.bf16.mxu0 0
  %1207 = vmatpush1.bf16.msra.mxu0 0
  %1208 = vmatprep.subr.bf16.mxu0 0
  %1209 = vmatpush1.bf16.msra.mxu0 0
  %1210 = vmatprep.subr.bf16.mxu0 0
  %1211 = vmatpush1.bf16.msra.mxu0 0
  %1212 = vmatprep.subr.bf16.mxu0 0
  %1213 = vmatpush1.bf16.msra.mxu0 0
  %1214 = vmatprep.mubr.bf16.mxu0 0
  %1215 = vmatmul.mubr.bf16.gmra.mrb[0].mxu0 %v1127
  %v1216 = vpop.f32.mrb[0].mxu0
  %v1217 = vadd.f32 %v1124, %v1216
  %v1218 = vpop.f32.mrb[0].mxu0
  %v1219 = vadd.f32 %v1124, %v1218
  %v1220 = vpop.f32.mrb[0].mxu0
  %v1221 = vpop.f32.mrb[0].mxu0
  %1222 = vdwg.mxu0
  %v1223 = vmax.f32 %v1176, 0.0
  %v1224 = vmax.f32 %v1178, 0.0
  %v1225 = vmax.f32 %v1217, 0.0
  %v1226 = vmax.f32 %v1219, 0.0
  %v1231 = vcombine.low %v1223, %v1224
  %v1232 = vcombine.low %v1225, %v1226
  %1235 = vst [vmem:[%s5] sm:$0xff] %v1231
  %1236 = vst [vmem:[%s5 + $0x8] sm:$0xff] %v1232
  // Predicated region
  $region22: #{diffusion_forward.1} parent=0 // pred_check
    _
  $region23: #{diffusion_forward.1} parent=0 // pred_check_branch
    %1238 = sbr.rel (0) target = $region25
  $region24: #{diffusion_forward.1} parent=0 // pred_region
    _
  $region25: #{diffusion_forward.1} parent=0 // pred_fallthru
    _
  // Predicated region
  $region26: #{diffusion_forward.1} parent=0 // pred_check
    _
  $region27: #{diffusion_forward.1} parent=0 // pred_check_branch
    %1240 = sbr.rel (0) target = $region29
  $region28: #{diffusion_forward.1} parent=0 // pred_region
    _
  $region29: #{diffusion_forward.1} parent=0 // pred_fallthru
    _

</llo_original>
